<compile_context>
chip_gen: v7x
topology: tpu7x:2x2x1
jax: 0.10.0
libtpu: 0.0.40
codegen_flags: <defaults>
</compile_context>

<pallas_src>
import jax
import jax.numpy as jnp
from jax.experimental import pallas as pl
from jax.experimental.pallas import tpu as pltpu


def _diag_gauss_kernel(mean_ref, logvar_ref, noise_ref, z_ref, kl_ref, acc_ref):
    mt = pl.program_id(1)
    n_mt = pl.num_programs(1)

    mean = mean_ref[...].astype(jnp.float32)
    logvar = jnp.clip(logvar_ref[...].astype(jnp.float32), -30.0, 20.0)
    std = jnp.exp(0.5 * logvar)          # single transcendental per element
    var = std * std                      # == exp(logvar), but on the VALU

    noise = noise_ref[...].astype(jnp.float32)
    # reparameterized sample: mean + std * eps
    z_ref[...] = (mean + std * noise).astype(z_ref.dtype)

    kl_terms = mean * mean + var - 1.0 - logvar

    @pl.when(mt == 0)
    def _init():
        acc_ref[...] = jnp.zeros_like(acc_ref)

    acc_ref[...] += kl_terms             # pure VALU accumulate per step

    @pl.when(mt == n_mt - 1)
    def _finalize():
        row = jnp.sum(acc_ref[...], axis=-1, keepdims=True)   # (R, 1)
        tot = jnp.sum(row, axis=0, keepdims=True)             # (1, 1)
        kl_ref[...] = jnp.broadcast_to(0.5 * tot, kl_ref.shape)


def _pick_lane_tile(m, cap=8192):
    """Largest multiple of 128 that divides m and is <= cap (else full m)."""
    if m % 128 != 0:
        return m
    best = 128
    t = 128
    while t <= min(m, cap):
        if m % t == 0:
            best = t
        t += 128
    return best


def diagonal_gaussian_regularizer(z, noise):
    """z: (B, 2C, H, W) NCHW; noise: (B, C, H, W) standard-normal draw.

    Returns (z_sample (B, C, H, W), {'kl_loss': scalar})."""
    B, C2, H, W = z.shape
    C = C2 // 2
    N = C * H * W

    # Fold each per-batch feature vector into R sublane rows of length M.
    R = 8 if (N % 8 == 0) else 1
    M = N // R
    TM = _pick_lane_tile(M)
    n_mt = M // TM

    # Free, contiguous reshape of NCHW: axis 1 index 0 = mean, 1 = logvar.
    z_r = z.reshape(B, 2, R, M)
    noise_r = noise.reshape(B, R, M).astype(z.dtype)

    z_s, kl_blk = pl.pallas_call(
        _diag_gauss_kernel,
        out_shape=(
            jax.ShapeDtypeStruct((B, R, M), z.dtype),
            jax.ShapeDtypeStruct((B, 8, 128), jnp.float32),
        ),
        grid_spec=pltpu.PrefetchScalarGridSpec(
            num_scalar_prefetch=0,
            grid=(B, n_mt),
            in_specs=[
                # mean slab (axis-1 index 0) of the original z buffer
                pl.BlockSpec((pl.Squeezed(), pl.Squeezed(), R, TM),
                             lambda b, mt: (b, 0, 0, mt)),
                # logvar slab (axis-1 index 1) of the same buffer
                pl.BlockSpec((pl.Squeezed(), pl.Squeezed(), R, TM),
                             lambda b, mt: (b, 1, 0, mt)),
                # noise
                pl.BlockSpec((pl.Squeezed(), R, TM),
                             lambda b, mt: (b, 0, mt)),
            ],
            out_specs=[
                # sampled z, written every step (lane-dense)
                pl.BlockSpec((pl.Squeezed(), R, TM),
                             lambda b, mt: (b, 0, mt)),
                # per-batch KL block, resident across the reduction axis
                pl.BlockSpec((pl.Squeezed(), 8, 128),
                             lambda b, mt: (b, 0, 0)),
            ],
            scratch_shapes=[pltpu.VMEM((R, TM), jnp.float32)],
        ),
        compiler_params=pltpu.CompilerParams(
            dimension_semantics=("parallel", "arbitrary")),
    )(z_r, z_r, noise_r)

    z_sample = z_s.reshape(B, C, H, W)
    kl_per_batch = kl_blk[:, 0, 0]                    # per-batch KL scalars
    # torch.sum(kl_loss) / kl_loss.shape[0]  (mean over batch) -- cheap glue
    kl_loss = jnp.sum(kl_per_batch) / B
    return z_sample, {"kl_loss": kl_loss}


def _reference(z, noise):
    B, C2, H, W = z.shape
    C = C2 // 2
    mean, logvar = z[:, :C], z[:, C:]
    logvar = jnp.clip(logvar, -30.0, 20.0)
    std = jnp.exp(0.5 * logvar)
    var = jnp.exp(logvar)
    z_s = mean + std * noise
    kl = 0.5 * jnp.sum(mean ** 2 + var - 1.0 - logvar, axis=(1, 2, 3))
    return z_s, jnp.sum(kl) / B


if __name__ == "__main__":
    key = jax.random.PRNGKey(0)
    k1, k2 = jax.random.split(key)

    B, C, H, W = 2, 4, 16, 16
    # Module input has 2*C channels (mean || logvar along dim=1).
    z = jax.random.normal(k1, (B, 2 * C, H, W), dtype=jnp.float32)
    # torch.randn equivalent: deterministic standard-normal noise for the
    # reparameterization trick (passed in explicitly for reproducibility).
    noise = jax.random.normal(k2, (B, C, H, W), dtype=jnp.float32)

    z_sample, log = diagonal_gaussian_regularizer(z, noise)
    z_sample = jax.block_until_ready(z_sample)
    kl_loss = jax.block_until_ready(log["kl_loss"])

    # sanity check against pure-JAX reference
    z_ref, kl_ref = _reference(z, noise)
    assert z_sample.shape == (B, C, H, W)
    assert jnp.allclose(z_sample, z_ref, atol=1e-5, rtol=1e-5)
    assert jnp.allclose(kl_loss, kl_ref, atol=1e-3, rtol=1e-5)

    print("KERNEL_OK")
</pallas_src>

<mosaic_0001>
module attributes {stable_mosaic.version = 11 : i64} {
  func.func @_diag_gauss_kernel(%arg0: i32, %arg1: i32, %arg2: memref<1x1x8x128xf32, #tpu.memory_space<vmem>>, %arg3: memref<1x1x8x128xf32, #tpu.memory_space<vmem>>, %arg4: memref<1x8x128xf32, #tpu.memory_space<vmem>>, %arg5: memref<1x8x128xf32, #tpu.memory_space<vmem>>, %arg6: memref<1x8x128xf32, #tpu.memory_space<vmem>>, %arg7: memref<8x128xf32, #tpu.memory_space<vmem>>) attributes {dimension_semantics = [#tpu.dimension_semantics<parallel>, #tpu.dimension_semantics<arbitrary>], iteration_bounds = array<i64: 2, 1>, scalar_prefetch = 0 : i64, scratch_operands = 1 : i64, tpu.core_type = #tpu.core_type<tc>, window_params = [{transform_indices = @transform_0, window_bounds = array<i64: 1, 1, 8, 128>}, {transform_indices = @transform_1, window_bounds = array<i64: 1, 1, 8, 128>}, {transform_indices = @transform_2, window_bounds = array<i64: 1, 8, 128>}, {transform_indices = @transform_3, window_bounds = array<i64: 1, 8, 128>}, {transform_indices = @transform_4, window_bounds = array<i64: 1, 8, 128>}]} {
    %c0 = arith.constant 0 : index
    %c0_0 = arith.constant 0 : index
    %c0_1 = arith.constant 0 : index
    %c0_2 = arith.constant 0 : index
    %0 = vector.load %arg2[%c0, %c0_0, %c0_1, %c0_2] : memref<1x1x8x128xf32, #tpu.memory_space<vmem>>, vector<1x1x8x128xf32>
    %1 = vector.shape_cast %0 : vector<1x1x8x128xf32> to vector<8x128xf32>
    %c0_3 = arith.constant 0 : index
    %c0_4 = arith.constant 0 : index
    %c0_5 = arith.constant 0 : index
    %c0_6 = arith.constant 0 : index
    %2 = vector.load %arg3[%c0_3, %c0_4, %c0_5, %c0_6] : memref<1x1x8x128xf32, #tpu.memory_space<vmem>>, vector<1x1x8x128xf32>
    %3 = vector.shape_cast %2 : vector<1x1x8x128xf32> to vector<8x128xf32>
    %cst = arith.constant -3.000000e+01 : f32
    %cst_7 = arith.constant 2.000000e+01 : f32
    %4 = vector.broadcast %cst : f32 to vector<8x128xf32>
    %5 = arith.maximumf %4, %3 : vector<8x128xf32>
    %6 = vector.broadcast %cst_7 : f32 to vector<8x128xf32>
    %7 = arith.minimumf %6, %5 : vector<8x128xf32>
    %cst_8 = arith.constant 5.000000e-01 : f32
    %8 = vector.broadcast %cst_8 : f32 to vector<8x128xf32>
    %9 = arith.mulf %8, %7 : vector<8x128xf32>
    %10 = math.exp %9 : vector<8x128xf32>
    %11 = arith.mulf %10, %10 : vector<8x128xf32>
    %c0_9 = arith.constant 0 : index
    %c0_10 = arith.constant 0 : index
    %c0_11 = arith.constant 0 : index
    %12 = vector.load %arg4[%c0_9, %c0_10, %c0_11] : memref<1x8x128xf32, #tpu.memory_space<vmem>>, vector<1x8x128xf32>
    %13 = vector.shape_cast %12 : vector<1x8x128xf32> to vector<8x128xf32>
    %14 = arith.mulf %10, %13 : vector<8x128xf32>
    %15 = arith.addf %1, %14 : vector<8x128xf32>
    %c0_12 = arith.constant 0 : index
    %c0_13 = arith.constant 0 : index
    %c0_14 = arith.constant 0 : index
    %16 = vector.load %arg5[%c0_12, %c0_13, %c0_14] : memref<1x8x128xf32, #tpu.memory_space<vmem>>, vector<1x8x128xf32>
    %17 = vector.shape_cast %16 : vector<1x8x128xf32> to vector<8x128xf32>
    %18 = vector.shape_cast %15 : vector<8x128xf32> to vector<1x8x128xf32>
    tpu.vector_store %arg5[%c0_12, %c0_13, %c0_14], %18 {strides = array<i32>} : memref<1x8x128xf32, #tpu.memory_space<vmem>>, vector<1x8x128xf32>,
    %19 = arith.mulf %1, %1 : vector<8x128xf32>
    %20 = arith.addf %19, %11 : vector<8x128xf32>
    %cst_15 = arith.constant 1.000000e+00 : f32
    %21 = vector.broadcast %cst_15 : f32 to vector<8x128xf32>
    %22 = arith.subf %20, %21 : vector<8x128xf32>
    %23 = arith.subf %22, %7 : vector<8x128xf32>
    %c0_i32 = arith.constant 0 : i32
    %24 = arith.cmpi eq, %arg1, %c0_i32 : i32
    %25 = arith.extui %24 : i1 to i32
    %c0_i32_16 = arith.constant 0 : i32
    %26 = arith.cmpi ne, %25, %c0_i32_16 : i32
    scf.if %26 {
      %cst_23 = arith.constant 0.000000e+00 : f32
      %33 = vector.broadcast %cst_23 : f32 to vector<8x128xf32>
      %c0_24 = arith.constant 0 : index
      %c0_25 = arith.constant 0 : index
      %34 = vector.load %arg7[%c0_24, %c0_25] : memref<8x128xf32, #tpu.memory_space<vmem>>, vector<8x128xf32>
      tpu.vector_store %arg7[%c0_24, %c0_25], %33 {strides = array<i32>} : memref<8x128xf32, #tpu.memory_space<vmem>>, vector<8x128xf32>,
    } else {
    }
    %c0_17 = arith.constant 0 : index
    %c0_18 = arith.constant 0 : index
    %27 = vector.load %arg7[%c0_17, %c0_18] : memref<8x128xf32, #tpu.memory_space<vmem>>, vector<8x128xf32>
    %28 = arith.addf %27, %23 : vector<8x128xf32>
    %c0_19 = arith.constant 0 : index
    %c0_20 = arith.constant 0 : index
    %29 = vector.load %arg7[%c0_19, %c0_20] : memref<8x128xf32, #tpu.memory_space<vmem>>, vector<8x128xf32>
    tpu.vector_store %arg7[%c0_19, %c0_20], %28 {strides = array<i32>} : memref<8x128xf32, #tpu.memory_space<vmem>>, vector<8x128xf32>,
    %c0_i32_21 = arith.constant 0 : i32
    %30 = arith.cmpi eq, %arg1, %c0_i32_21 : i32
    %31 = arith.extui %30 : i1 to i32
    %c0_i32_22 = arith.constant 0 : i32
    %32 = arith.cmpi ne, %31, %c0_i32_22 : i32
    scf.if %32 {
      %c0_23 = arith.constant 0 : index
      %c0_24 = arith.constant 0 : index
      %33 = vector.load %arg7[%c0_23, %c0_24] : memref<8x128xf32, #tpu.memory_space<vmem>>, vector<8x128xf32>
      %cst_25 = arith.constant dense<0.000000e+00> : vector<8xf32>
      %34 = vector.multi_reduction <add>, %33, %cst_25 [1] : vector<8x128xf32> to vector<8xf32>
      %35 = vector.shape_cast %34 : vector<8xf32> to vector<8x1xf32>
      %cst_26 = arith.constant dense<0.000000e+00> : vector<1xf32>
      %36 = vector.multi_reduction <add>, %35, %cst_26 [0] : vector<8x1xf32> to vector<1xf32>
      %37 = vector.shape_cast %36 : vector<1xf32> to vector<1x1xf32>
      %cst_27 = arith.constant 5.000000e-01 : f32
      %38 = vector.broadcast %cst_27 : f32 to vector<1x1xf32>
      %39 = arith.mulf %38, %37 : vector<1x1xf32>
      %40 = vector.shape_cast %39 : vector<1x1xf32> to vector<1x1xf32>
      %41 = vector.broadcast %40 : vector<1x1xf32> to vector<8x128xf32>
      %c0_28 = arith.constant 0 : index
      %c0_29 = arith.constant 0 : index
      %c0_30 = arith.constant 0 : index
      %42 = vector.load %arg6[%c0_28, %c0_29, %c0_30] : memref<1x8x128xf32, #tpu.memory_space<vmem>>, vector<1x8x128xf32>
      %43 = vector.shape_cast %42 : vector<1x8x128xf32> to vector<8x128xf32>
      %44 = vector.shape_cast %41 : vector<8x128xf32> to vector<1x8x128xf32>
      tpu.vector_store %arg6[%c0_28, %c0_29, %c0_30], %44 {strides = array<i32>} : memref<1x8x128xf32, #tpu.memory_space<vmem>>, vector<1x8x128xf32>,
    } else {
    }
    return
  }
  func.func @transform_0(%arg0: i32, %arg1: i32) -> (i32, i32, i32, i32) {
    %c0_i32 = arith.constant 0 : i32
    %c0_i32_0 = arith.constant 0 : i32
    %c0_i32_1 = arith.constant 0 : i32
    return %arg0, %c0_i32, %c0_i32_0, %arg1 : i32, i32, i32, i32
  }
  func.func @transform_1(%arg0: i32, %arg1: i32) -> (i32, i32, i32, i32) {
    %c1_i32 = arith.constant 1 : i32
    %c0_i32 = arith.constant 0 : i32
    %c0_i32_0 = arith.constant 0 : i32
    return %arg0, %c1_i32, %c0_i32, %arg1 : i32, i32, i32, i32
  }
  func.func @transform_2(%arg0: i32, %arg1: i32) -> (i32, i32, i32) {
    %c0_i32 = arith.constant 0 : i32
    %c0_i32_0 = arith.constant 0 : i32
    return %arg0, %c0_i32, %arg1 : i32, i32, i32
  }
  func.func @transform_3(%arg0: i32, %arg1: i32) -> (i32, i32, i32) {
    %c0_i32 = arith.constant 0 : i32
    %c0_i32_0 = arith.constant 0 : i32
    return %arg0, %c0_i32, %arg1 : i32, i32, i32
  }
  func.func @transform_4(%arg0: i32, %arg1: i32) -> (i32, i32, i32) {
    %c0_i32 = arith.constant 0 : i32
    %c0_i32_0 = arith.constant 0 : i32
    %c0_i32_1 = arith.constant 0 : i32
    return %arg0, %c0_i32, %c0_i32_0 : i32, i32, i32
  }
}

</mosaic_0001>

<llo_original>
// kernel: tpu_custom_call.1
$region0: #{tpu_custom_call.1}
  #allocation0 [shape = 'u32[]', space=smem, size = 0x4, offset = 0x4, fixed_abs, tag = 'smem constant byte address 0x4 - core index']
  #allocation1 [shape = 'u32[144,128]{1,0:T(1,128)}', space=vmem, size = 0x12000, scoped, tag = 'internal scratch']
  #allocation2 [shape = 'f32[8,128]{1,0:T(8,128)}', space=vmem, size = 0x1000, scoped, tag = 'scratch operand']
  %s0 = inlined_call_operand.hbm [shape: f32[2,2,8,128], index: 0, kind: input, shape index: {}]
  %s1 = inlined_call_operand.hbm [shape: f32[2,2,8,128], index: 1, kind: input, shape index: {}]
  %s2 = inlined_call_operand.hbm [shape: f32[2,8,128], index: 2, kind: input, shape index: {}]
  %s3 = inlined_call_operand.hbm [shape: f32[2,8,128], index: 3, kind: output, shape index: {0}]
  %s4 = inlined_call_operand.hbm [shape: f32[2,8,128], index: 4, kind: output, shape index: {1}]
  %5 = xla_tuple %s3, %s4
  %s6 = sld [smem:[#allocation0]]
  $region73: #{tpu_custom_call.1} parent=0
    _
  %s8 = ssub.s32 1, %s6
  %s9 = scalar_select 0, %s8, %s6
  $region1: #{tpu_custom_call.1} parent=0
    #allocation3 [shape = 'u8[8192]{0}', space=vmem, size = 0x2000, scoped, tag = 'input window, operand 0']
    #allocation4 [shape = 's32[2]{0}', space=sflag, size = 0x8, scoped, tag = 'scoped memory for tpu_custom_call.1']
    #allocation5 [shape = 's32[2]{0}', space=sflag, size = 0x8, scoped, tag = 'scoped memory for tpu_custom_call.1']
    #allocation6 [shape = 'u8[8192]{0}', space=vmem, size = 0x2000, scoped, tag = 'input window, operand 1']
    #allocation7 [shape = 's32[2]{0}', space=sflag, size = 0x8, scoped, tag = 'scoped memory for tpu_custom_call.1']
    #allocation8 [shape = 'u8[8192]{0}', space=vmem, size = 0x2000, scoped, tag = 'input window, operand 2']
    #allocation9 [shape = 'u8[8192]{0}', space=vmem, size = 0x2000, scoped, tag = 'output window, operand 0']
    #allocation10 [shape = 'u8[8192]{0}', space=vmem, size = 0x2000, scoped, tag = 'output window, operand 1']
    #allocation11 [shape = 's32[2]{0}', space=sflag, size = 0x8, scoped, tag = 'scoped memory for tpu_custom_call.1']
    %10 = vsyncpa [#allocation4], 0
    %s11 = scalar_lea.sflag [#allocation4], 1
    %12 = vsyncpa %s11, 0
    %13 = vsyncpa [#allocation7], 0
    %s14 = scalar_lea.sflag [#allocation7], 1
    %15 = vsyncpa %s14, 0
    %16 = vsyncpa [#allocation5], 0
    %s17 = scalar_lea.sflag [#allocation5], 1
    %18 = vsyncpa %s17, 0
    %19 = vsyncpa [#allocation11], 0
    %s20 = scalar_lea.sflag [#allocation11], 1
    %21 = vsyncpa %s20, 0
    loop: start=0, step=1, limit=4
    $region2: #{tpu_custom_call.1} parent=1 // loop_pre_header
      _
    $region3: #{tpu_custom_call.1} parent=1 // loop_header
      %s23 = sphi 0, %s27
      %p24 = scmp.ge.s32.totalorder %s23, 4
      %s30 = sphi 0, %s42
      %s31 = sphi 0, %s38
      %s32 = sphi 0, %s30
      %s33 = sphi 0, %s31
      %s34 = sphi 0, %s32
      %s35 = sphi 0, %s33
      %s47 = sphi 0, %s49
      %s50 = sphi 0, %s47
      %s51 = sphi 0, %s50
      %s67 = sphi 0, %s51
      %s75 = sphi 0, %s77
      %s78 = sphi 0, %s75
      %s79 = sphi 0, %s78
      %s95 = sphi 0, %s79
      %s103 = sphi 0, %s105
      %s106 = sphi 0, %s103
      %s107 = sphi 0, %s106
      %s123 = sphi 0, %s107
      %s131 = sphi 0, %s133
      %s134 = sphi 0, %s131
      %s135 = sphi 0, %s134
      %s151 = sphi 0, %s135
      %s157 = sphi 0, %s159
      %s160 = sphi 0, %s157
      %s161 = sphi 0, %s160
      %s177 = sphi 0, %s161
    $region4: #{tpu_custom_call.1} parent=1 // loop_header_branch
      %26 = sbr.rel (%p24) target = $region8
    $region5: #{tpu_custom_call.1} parent=1 // loop_body
      %s28 = ssub.s32 %s23, 1
      %s29 = ssub.s32 %s23, 2
      %s36 = sadd.s32 1, %s31
      %p37 = scmp.ge.s32.totalorder %s36, 1
      %s38 = scalar_select %p37, 0, %s36
      %s39 = sadd.s32 1, %s30
      %s40 = scalar_select %p37, %s39, %s30
      %p41 = scmp.ge.s32.totalorder %s40, 2
      %s42 = scalar_select %p41, 0, %s40
      %s43 = ssub.s32 %s30, %s42
      %s44 = ssub.s32 %s31, %s38
      %s45 = sor.u32 %s43, %s44
      %p46 = scmp.eq.s32.totalorder %s45, 0
      %s48 = sadd.s32 %s47, 1
      %s49 = scalar_select %p46, %s47, %s48
      %p52 = pneg %p46
      %p53 = scmp.eq.s32.totalorder %s23, 1
      %p54 = por %p52, %p53
      %p55 = scmp.ne.s32.totalorder %s47, %s50
      %p56 = scmp.eq.s32.totalorder %s23, 0
      %p57 = por %p55, %p56
      %p58 = scmp.ne.s32.totalorder %s47, %s50
      %p59 = scmp.eq.s32.totalorder %s28, 1
      %p60 = por %p58, %p59
      %p61 = scmp.ne.s32.totalorder %s50, %s51
      %p62 = scmp.eq.s32.totalorder %s28, 0
      %p63 = por %p61, %p62
      %p64 = scmp.ne.s32.totalorder %s50, %s51
      %p65 = scmp.eq.s32.totalorder %s29, 1
      %p66 = por %p64, %p65
      %p68 = scmp.ne.s32.totalorder %s51, %s67
      %p69 = scmp.eq.s32.totalorder %s29, 0
      %p70 = por %p68, %p69
      %s71 = ssub.s32 %s30, %s42
      %s72 = ssub.s32 %s31, %s38
      %s73 = sor.u32 %s71, %s72
      %p74 = scmp.eq.s32.totalorder %s73, 0
      %s76 = sadd.s32 %s75, 1
      %s77 = scalar_select %p74, %s75, %s76
      %p80 = pneg %p74
      %p81 = scmp.eq.s32.totalorder %s23, 1
      %p82 = por %p80, %p81
      %p83 = scmp.ne.s32.totalorder %s75, %s78
      %p84 = scmp.eq.s32.totalorder %s23, 0
      %p85 = por %p83, %p84
      %p86 = scmp.ne.s32.totalorder %s75, %s78
      %p87 = scmp.eq.s32.totalorder %s28, 1
      %p88 = por %p86, %p87
      %p89 = scmp.ne.s32.totalorder %s78, %s79
      %p90 = scmp.eq.s32.totalorder %s28, 0
      %p91 = por %p89, %p90
      %p92 = scmp.ne.s32.totalorder %s78, %s79
      %p93 = scmp.eq.s32.totalorder %s29, 1
      %p94 = por %p92, %p93
      %p96 = scmp.ne.s32.totalorder %s79, %s95
      %p97 = scmp.eq.s32.totalorder %s29, 0
      %p98 = por %p96, %p97
      %s99 = ssub.s32 %s30, %s42
      %s100 = ssub.s32 %s31, %s38
      %s101 = sor.u32 %s99, %s100
      %p102 = scmp.eq.s32.totalorder %s101, 0
      %s104 = sadd.s32 %s103, 1
      %s105 = scalar_select %p102, %s103, %s104
      %p108 = pneg %p102
      %p109 = scmp.eq.s32.totalorder %s23, 1
      %p110 = por %p108, %p109
      %p111 = scmp.ne.s32.totalorder %s103, %s106
      %p112 = scmp.eq.s32.totalorder %s23, 0
      %p113 = por %p111, %p112
      %p114 = scmp.ne.s32.totalorder %s103, %s106
      %p115 = scmp.eq.s32.totalorder %s28, 1
      %p116 = por %p114, %p115
      %p117 = scmp.ne.s32.totalorder %s106, %s107
      %p118 = scmp.eq.s32.totalorder %s28, 0
      %p119 = por %p117, %p118
      %p120 = scmp.ne.s32.totalorder %s106, %s107
      %p121 = scmp.eq.s32.totalorder %s29, 1
      %p122 = por %p120, %p121
      %p124 = scmp.ne.s32.totalorder %s107, %s123
      %p125 = scmp.eq.s32.totalorder %s29, 0
      %p126 = por %p124, %p125
      %s127 = ssub.s32 %s30, %s42
      %s128 = ssub.s32 %s31, %s38
      %s129 = sor.u32 %s127, %s128
      %p130 = scmp.eq.s32.totalorder %s129, 0
      %s132 = sadd.s32 %s131, 1
      %s133 = scalar_select %p130, %s131, %s132
      %p136 = pneg %p130
      %p137 = scmp.eq.s32.totalorder %s23, 1
      %p138 = por %p136, %p137
      %p139 = scmp.ne.s32.totalorder %s131, %s134
      %p140 = scmp.eq.s32.totalorder %s23, 0
      %p141 = por %p139, %p140
      %p142 = scmp.ne.s32.totalorder %s131, %s134
      %p143 = scmp.eq.s32.totalorder %s28, 1
      %p144 = por %p142, %p143
      %p145 = scmp.ne.s32.totalorder %s134, %s135
      %p146 = scmp.eq.s32.totalorder %s28, 0
      %p147 = por %p145, %p146
      %p148 = scmp.ne.s32.totalorder %s134, %s135
      %p149 = scmp.eq.s32.totalorder %s29, 1
      %p150 = por %p148, %p149
      %p152 = scmp.ne.s32.totalorder %s135, %s151
      %p153 = scmp.eq.s32.totalorder %s29, 0
      %p154 = por %p152, %p153
      %s155 = ssub.s32 %s30, %s42
      %p156 = scmp.eq.s32.totalorder %s155, 0
      %s158 = sadd.s32 %s157, 1
      %s159 = scalar_select %p156, %s157, %s158
      %p162 = pneg %p156
      %p163 = scmp.eq.s32.totalorder %s23, 1
      %p164 = por %p162, %p163
      %p165 = scmp.ne.s32.totalorder %s157, %s160
      %p166 = scmp.eq.s32.totalorder %s23, 0
      %p167 = por %p165, %p166
      %p168 = scmp.ne.s32.totalorder %s157, %s160
      %p169 = scmp.eq.s32.totalorder %s28, 1
      %p170 = por %p168, %p169
      %p171 = scmp.ne.s32.totalorder %s160, %s161
      %p172 = scmp.eq.s32.totalorder %s28, 0
      %p173 = por %p171, %p172
      %p174 = scmp.ne.s32.totalorder %s160, %s161
      %p175 = scmp.eq.s32.totalorder %s29, 1
      %p176 = por %p174, %p175
      %p178 = scmp.ne.s32.totalorder %s161, %s177
      %p179 = scmp.eq.s32.totalorder %s29, 0
      %p180 = por %p178, %p179
      %p181 = scmp.le.s32.totalorder 1, %s23
      %p182 = scmp.lt.s32.totalorder %s23, 3
      %p183 = pnand %p181, %p182
      %p184 = pneg %p183
      // Predicated region
      $region9: #{tpu_custom_call.1} parent=5 // pred_check
        _
      $region10: #{tpu_custom_call.1} parent=5 // pred_check_branch
        %186 = sbr.rel (%p183) target = $region12
      $region11: #{tpu_custom_call.1} parent=5 // pred_region
        %s187 = ssub.s32 %s23, 1
      $region12: #{tpu_custom_call.1} parent=5 // pred_fallthru
        _
      %p188 = scmp.lt.s32.totalorder %s23, 2
      // Predicated region
      $region13: #{tpu_custom_call.1} parent=5 // pred_check
        %p189 = pneg %p188
      $region14: #{tpu_custom_call.1} parent=5 // pred_check_branch
        %191 = sbr.rel (%p189) target = $region16
      $region15: #{tpu_custom_call.1} parent=5 // pred_region
        // Predicated region
        $region17: #{tpu_custom_call.1} parent=15 // pred_check
          %p192 = pneg %p57
        $region18: #{tpu_custom_call.1} parent=15 // pred_check_branch
          %194 = sbr.rel (%p192) target = $region20
        $region19: #{tpu_custom_call.1} parent=15 // pred_region
          %s195 = sand.u32 %s47, 1
          %s196 = scalar_lea.sflag [#allocation4], %s195
          %s197 = sand.u32 %s47, 1
          %s198 = smul.addr %s197, 8
          %s199 = scalar_lea.vmem [#allocation3], %s198
          %s201 = ssub.s32 128, 128
          %202 = vsyncadd %s196, %s201
          %s203 = smul.addr %s30, 2
          %s204 = sadd.s32 %s31, %s203
          %s205 = smul.addr %s204, 128
          %s206 = scalar_lea.hbm %s0, %s205
          %s208 = sshll.u32 %s199, 4
          %s209 = int_to_ptr.vmem [resolvable:$true] %s208
          %211 = dma.hbm_to_vmem [thread:$0]  %s206, 128, %s209, %s196
        $region20: #{tpu_custom_call.1} parent=15 // pred_fallthru
          _
        // Predicated region
        $region21: #{tpu_custom_call.1} parent=15 // pred_check
          %p212 = pneg %p85
        $region22: #{tpu_custom_call.1} parent=15 // pred_check_branch
          %214 = sbr.rel (%p212) target = $region24
        $region23: #{tpu_custom_call.1} parent=15 // pred_region
          %s215 = sand.u32 %s23, 1
          %s216 = scalar_lea.sflag [#allocation7], %s215
          %s217 = sand.u32 %s75, 1
          %s218 = smul.addr %s217, 8
          %s219 = scalar_lea.vmem [#allocation6], %s218
          %s221 = ssub.s32 128, 128
          %222 = vsyncadd %s216, %s221
          %s223 = sadd.s32 %s31, 1
          %s224 = smul.addr %s30, 2
          %s225 = sadd.s32 %s223, %s224
          %s226 = smul.addr %s225, 128
          %s227 = scalar_lea.hbm %s1, %s226
          %s229 = sshll.u32 %s219, 4
          %s230 = int_to_ptr.vmem [resolvable:$true] %s229
          %232 = dma.hbm_to_vmem [thread:$0]  %s227, 128, %s230, %s216
        $region24: #{tpu_custom_call.1} parent=15 // pred_fallthru
          _
        // Predicated region
        $region25: #{tpu_custom_call.1} parent=15 // pred_check
          %p233 = pneg %p113
        $region26: #{tpu_custom_call.1} parent=15 // pred_check_branch
          %235 = sbr.rel (%p233) target = $region28
        $region27: #{tpu_custom_call.1} parent=15 // pred_region
          %s236 = sand.u32 %s23, 1
          %s237 = scalar_lea.sflag [#allocation7], %s236
          %s238 = sand.u32 %s103, 1
          %s239 = smul.addr %s238, 8
          %s240 = scalar_lea.vmem [#allocation8], %s239
          %s242 = ssub.s32 128, 128
          %243 = vsyncadd %s237, %s242
          %s244 = sadd.s32 %s31, %s30
          %s245 = smul.addr %s244, 128
          %s246 = scalar_lea.hbm %s2, %s245
          %s248 = sshll.u32 %s240, 4
          %s249 = int_to_ptr.vmem [resolvable:$true] %s248
          %251 = dma.hbm_to_vmem [thread:$0]  %s246, 128, %s249, %s237
        $region28: #{tpu_custom_call.1} parent=15 // pred_fallthru
          _
      $region16: #{tpu_custom_call.1} parent=5 // pred_fallthru
        _
      %p252 = scmp.le.s32.totalorder 1, %s23
      %p253 = scmp.lt.s32.totalorder %s23, 3
      %p254 = pnand %p252, %p253
      %p255 = pneg %p254
      // Predicated region
      $region29: #{tpu_custom_call.1} parent=5 // pred_check
        _
      $region30: #{tpu_custom_call.1} parent=5 // pred_check_branch
        %257 = sbr.rel (%p254) target = $region32
      $region31: #{tpu_custom_call.1} parent=5 // pred_region
        %s258 = ssub.s32 %s23, 1
        %s259 = sand.u32 %s50, 1
        %s260 = scalar_lea.sflag [#allocation4], %s259
        %s261 = sand.u32 %s50, 1
        %s262 = smul.addr %s261, 8
        %s263 = scalar_lea.vmem [#allocation3], %s262
        // Predicated region
        $region33: #{tpu_custom_call.1} parent=31 // pred_check
          %p264 = pneg %p63
        $region34: #{tpu_custom_call.1} parent=31 // pred_check_branch
          %266 = sbr.rel (%p264) target = $region36
        $region35: #{tpu_custom_call.1} parent=31 // pred_region
          %267 = dma.done %s260, 128
        $region36: #{tpu_custom_call.1} parent=31 // pred_fallthru
          _
        %s268 = sand.u32 %s28, 1
        %s269 = scalar_lea.sflag [#allocation7], %s268
        %s270 = sand.u32 %s78, 1
        %s271 = smul.addr %s270, 8
        %s272 = scalar_lea.vmem [#allocation6], %s271
        // Predicated region
        $region37: #{tpu_custom_call.1} parent=31 // pred_check
          %p273 = pneg %p91
        $region38: #{tpu_custom_call.1} parent=31 // pred_check_branch
          %275 = sbr.rel (%p273) target = $region40
        $region39: #{tpu_custom_call.1} parent=31 // pred_region
          %276 = dma.done %s269, 128
        $region40: #{tpu_custom_call.1} parent=31 // pred_fallthru
          _
        %s277 = sand.u32 %s28, 1
        %s278 = scalar_lea.sflag [#allocation7], %s277
        %s279 = sand.u32 %s106, 1
        %s280 = smul.addr %s279, 8
        %s281 = scalar_lea.vmem [#allocation8], %s280
        // Predicated region
        $region41: #{tpu_custom_call.1} parent=31 // pred_check
          %p282 = pneg %p119
        $region42: #{tpu_custom_call.1} parent=31 // pred_check_branch
          %284 = sbr.rel (%p282) target = $region44
        $region43: #{tpu_custom_call.1} parent=31 // pred_region
          %285 = dma.done %s278, 128
        $region44: #{tpu_custom_call.1} parent=31 // pred_fallthru
          _
        %s286 = sand.u32 %s50, 1
        %s287 = scalar_lea.sflag [#allocation4], %s286
        %s288 = sand.u32 %s50, 1
        %s289 = smul.addr %s288, 8
        %s290 = scalar_lea.vmem [#allocation3], %s289
        %p291 = pneg %p63
        %p292 = pneg %p60
        %s293 = sand.u32 %s28, 1
        %s294 = scalar_lea.sflag [#allocation7], %s293
        %s295 = sand.u32 %s78, 1
        %s296 = smul.addr %s295, 8
        %s297 = scalar_lea.vmem [#allocation6], %s296
        %p298 = pneg %p91
        %p299 = pneg %p88
        %s300 = sand.u32 %s28, 1
        %s301 = scalar_lea.sflag [#allocation7], %s300
        %s302 = sand.u32 %s106, 1
        %s303 = smul.addr %s302, 8
        %s304 = scalar_lea.vmem [#allocation8], %s303
        %p305 = pneg %p119
        %p306 = pneg %p116
        %p307 = pneg %p147
        %p308 = pneg %p144
        %s309 = sand.u32 %s134, 1
        %s310 = scalar_lea.sflag [#allocation5], %s309
        %s311 = sand.u32 %s134, 1
        %s312 = smul.addr %s311, 8
        %s313 = scalar_lea.vmem [#allocation9], %s312
        %p314 = pneg %p173
        %p315 = pneg %p170
        %s316 = sand.u32 %s160, 1
        %s317 = scalar_lea.sflag [#allocation11], %s316
        %s318 = sand.u32 %s160, 1
        %s319 = smul.addr %s318, 8
        %s320 = scalar_lea.vmem [#allocation10], %s319
        %v321 = vld [vmem:[%s263] sm:$0xff]
        %v322 = vld [vmem:[%s272] sm:$0xff]
        %v323 = vmax.f32 %v322, -30.0
        %v324 = vmin.f32 %v323, 20.0
        %v325 = vmul.f32 %v324, 0.5
        %v326 = vmul.f32 %v325, 1.442695
        %v327 = vpow.pop %v326
        %v328 = vmul.f32 %v327, %v327
        %v329 = vld [vmem:[%s281] sm:$0xff]
        %v330 = vmul.f32 %v327, %v329
        %v331 = vadd.f32 %v321, %v330
        %332 = vst [vmem:[%s313] sm:$0xff] %v331
        %v333 = vmul.f32 %v321, %v321
        %v334 = vadd.f32 %v333, %v328
        %v335 = vsub.f32 %v334, 1.0
        %v336 = vsub.f32 %v335, %v324
        %p337 = scmp.eq.s32.totalorder %s33, 0
        // Predicated region
        $region45: #{tpu_custom_call.1} parent=31 // pred_check
          %p338 = pneg %p337
        $region46: #{tpu_custom_call.1} parent=31 // pred_check_branch
          %340 = sbr.rel (%p338) target = $region48
        $region47: #{tpu_custom_call.1} parent=31 // pred_region
          %341 = vst [vmem:[#allocation2] sm:$0xff] 0.0
        $region48: #{tpu_custom_call.1} parent=31 // pred_fallthru
          _
        %v342 = vld [vmem:[#allocation2] sm:$0xff]
        %v343 = vadd.f32 %v342, %v336
        %344 = vst [vmem:[#allocation2] sm:$0xff] %v343
        // Predicated region
        $region49: #{tpu_custom_call.1} parent=31 // pred_check
          %p345 = pneg %p337
        $region50: #{tpu_custom_call.1} parent=31 // pred_check_branch
          %347 = sbr.rel (%p345) target = $region52
        $region51: #{tpu_custom_call.1} parent=31 // pred_region
          %v348 = vld [vmem:[#allocation2] sm:$0xff]
          %349 = vadd.xlane.f32.xlu0 %v348
          %v350 = vpop.xlane.xlu0 %349
          %v351 = vrot.slane %v350, 4
          %v352 = vadd.f32 %v350, %v351
          %v353 = vrot.slane %v352, 2
          %v354 = vadd.f32 %v352, %v353
          %v355 = vrot.slane %v354, 1
          %v356 = vadd.f32 %v354, %v355
          %v357 = vmul.f32 %v356, 0.5
          %358 = vst [vmem:[%s320] sm:$0xff] %v357
        $region52: #{tpu_custom_call.1} parent=31 // pred_fallthru
          _
        %s359 = sand.u32 %s134, 1
        %s360 = scalar_lea.sflag [#allocation5], %s359
        %s361 = sand.u32 %s134, 1
        %s362 = smul.addr %s361, 8
        %s363 = scalar_lea.vmem [#allocation9], %s362
        %s364 = sand.u32 %s160, 1
        %s365 = scalar_lea.sflag [#allocation11], %s364
        %s366 = sand.u32 %s160, 1
        %s367 = smul.addr %s366, 8
        %s368 = scalar_lea.vmem [#allocation10], %s367
        // Predicated region
        $region53: #{tpu_custom_call.1} parent=31 // pred_check
          %p369 = pneg %p144
        $region54: #{tpu_custom_call.1} parent=31 // pred_check_branch
          %371 = sbr.rel (%p369) target = $region56
        $region55: #{tpu_custom_call.1} parent=31 // pred_region
          %s373 = ssub.s32 128, 128
          %374 = vsyncadd %s360, %s373
          %s375 = sadd.s32 %s33, %s32
          %s376 = smul.addr %s375, 128
          %s377 = scalar_lea.hbm %s3, %s376
          %s379 = sshll.u32 %s363, 4
          %s380 = int_to_ptr.vmem [resolvable:$true] %s379
          %382 = dma.vmem_to_hbm [thread:$0]  %s380, 128, %s377, %s360
        $region56: #{tpu_custom_call.1} parent=31 // pred_fallthru
          _
        // Predicated region
        $region57: #{tpu_custom_call.1} parent=31 // pred_check
          %p383 = pneg %p170
        $region58: #{tpu_custom_call.1} parent=31 // pred_check_branch
          %385 = sbr.rel (%p383) target = $region60
        $region59: #{tpu_custom_call.1} parent=31 // pred_region
          %s387 = ssub.s32 128, 128
          %388 = vsyncadd %s365, %s387
          %s389 = smul.addr %s32, 128
          %s390 = scalar_lea.hbm %s4, %s389
          %s392 = sshll.u32 %s368, 4
          %s393 = int_to_ptr.vmem [resolvable:$true] %s392
          %395 = dma.vmem_to_hbm [thread:$0]  %s393, 128, %s390, %s365
        $region60: #{tpu_custom_call.1} parent=31 // pred_fallthru
          _
      $region32: #{tpu_custom_call.1} parent=5 // pred_fallthru
        _
      %p396 = scmp.le.s32.totalorder 2, %s23
      // Predicated region
      $region61: #{tpu_custom_call.1} parent=5 // pred_check
        %p397 = pneg %p396
      $region62: #{tpu_custom_call.1} parent=5 // pred_check_branch
        %399 = sbr.rel (%p397) target = $region64
      $region63: #{tpu_custom_call.1} parent=5 // pred_region
        %s400 = ssub.s32 %s23, 2
        // Predicated region
        $region65: #{tpu_custom_call.1} parent=63 // pred_check
          %p401 = pneg %p150
        $region66: #{tpu_custom_call.1} parent=63 // pred_check_branch
          %403 = sbr.rel (%p401) target = $region68
        $region67: #{tpu_custom_call.1} parent=63 // pred_region
          %s404 = sand.u32 %s135, 1
          %s405 = scalar_lea.sflag [#allocation5], %s404
          %s406 = sand.u32 %s135, 1
          %s407 = smul.addr %s406, 8
          %s408 = scalar_lea.vmem [#allocation9], %s407
          %409 = dma.done %s405, 128
        $region68: #{tpu_custom_call.1} parent=63 // pred_fallthru
          _
        // Predicated region
        $region69: #{tpu_custom_call.1} parent=63 // pred_check
          %p410 = pneg %p176
        $region70: #{tpu_custom_call.1} parent=63 // pred_check_branch
          %412 = sbr.rel (%p410) target = $region72
        $region71: #{tpu_custom_call.1} parent=63 // pred_region
          %s413 = sand.u32 %s161, 1
          %s414 = scalar_lea.sflag [#allocation11], %s413
          %s415 = sand.u32 %s161, 1
          %s416 = smul.addr %s415, 8
          %s417 = scalar_lea.vmem [#allocation10], %s416
          %418 = dma.done %s414, 128
        $region72: #{tpu_custom_call.1} parent=63 // pred_fallthru
          _
      $region64: #{tpu_custom_call.1} parent=5 // pred_fallthru
        _
    $region6: #{tpu_custom_call.1} parent=1 // loop_footer
      %s27 = sadd.s32 1, %s23
    $region7: #{tpu_custom_call.1} parent=1 // loop_footer_branch
      %22 = sbr.rel target = $region3
    $region8: #{tpu_custom_call.1} parent=1 // loop_exit
      _
    %419 = vsyncpa [#allocation4], 1
    %s420 = scalar_lea.sflag [#allocation4], 1
    %421 = vsyncpa %s420, 1
    %422 = vsyncpa [#allocation7], 1
    %s423 = scalar_lea.sflag [#allocation7], 1
    %424 = vsyncpa %s423, 1
    %425 = vsyncpa [#allocation5], 1
    %s426 = scalar_lea.sflag [#allocation5], 1
    %427 = vsyncpa %s426, 1
    %428 = vsyncpa [#allocation11], 1
    %s429 = scalar_lea.sflag [#allocation11], 1
    %430 = vsyncpa %s429, 1

</llo_original>
